<compile_context>
chip_gen: v5e
topology: v5e:2x2
jax: 0.10.0
libtpu: 0.0.40
codegen_flags: <defaults>
</compile_context>

<pallas_src>
import math

import jax
import jax.numpy as jnp
from jax.experimental import pallas as pl
from jax.experimental.pallas import tpu as pltpu


def _round_up(n, m):
    return ((n + m - 1) // m) * m


# ----------------------------------------------------------------------------- kernel

def _mlp_kernel(x_ref, w1_ref, b1_ref, w2_ref, b2_ref, o_ref, acc_ref):
    # grid = (row tiles, hidden tiles); hidden axis is the reduction (last, "arbitrary").
    k = pl.program_id(1)

    @pl.when(k == 0)
    def _init():
        acc_ref[...] = jnp.zeros_like(acc_ref)

    # First matmul on the MXU in bf16, accumulate f32.  x tile is VMEM-resident
    # across the hidden axis (constant block index), so the cast is cheap VPU work.
    x_bf = x_ref[...].astype(jnp.bfloat16)
    h = jnp.dot(x_bf, w1_ref[...], preferred_element_type=jnp.float32)
    h = h + b1_ref[...]                      # bias add in f32

    # tanh-GELU in f32 (matches nn.GELU('tanh')); tanh goes to the EUP slot.
    c = 0.7978845608028654                   # sqrt(2/pi)
    h = 0.5 * h * (1.0 + jnp.tanh(c * (h + 0.044715 * h * h * h)))

    # Second matmul: bf16 inputs, f32 accumulation into the scratch accumulator.
    acc_ref[...] += jnp.dot(h.astype(jnp.bfloat16), w2_ref[...],
                            preferred_element_type=jnp.float32)

    @pl.when(k == pl.num_programs(1) - 1)
    def _finalize():
        o_ref[...] = (acc_ref[...] + b2_ref[...]).astype(o_ref.dtype)


# ----------------------------------------------------------------------------- wrapper

def masked_prediction_branch(x, w1_t, b1, w2_t, b2, *,
                             max_block_rows=512, max_h_tile=2048):
    """x: [..., E]; w1_t: (E, H); b1: (1, H); w2_t: (H, F); b2: (1, F) -> [..., F]."""
    orig_lead = x.shape[:-1]
    E = x.shape[-1]
    H = w1_t.shape[1]
    F = w2_t.shape[1]
    M = int(math.prod(orig_lead)) if orig_lead else 1
    x2d = x.reshape(M, E)

    # ---- pad H / F up to multiples of 128 (weights/biases only; exact math) -------
    th = min(_round_up(H, 128), max_h_tile)       # hidden tile, multiple of 128
    H_pad = _round_up(H, th)
    F_pad = _round_up(F, 128)
    w1p = jnp.pad(w1_t, ((0, 0), (0, H_pad - H))).astype(jnp.bfloat16)
    b1p = jnp.pad(jnp.asarray(b1, jnp.float32).reshape(1, -1),
                  ((0, 0), (0, H_pad - H)))
    w2p = jnp.pad(w2_t, ((0, H_pad - H), (0, F_pad - F))).astype(jnp.bfloat16)
    b2p = jnp.pad(jnp.asarray(b2, jnp.float32).reshape(1, -1),
                  ((0, 0), (0, F_pad - F)))
    n_k = H_pad // th

    # ---- per-generation VMEM sizing -----------------------------------------------
    try:
        vmem_phys = pltpu.get_tpu_info().vmem_capacity_bytes   # 128 MiB v5e/v6e, 64 MiB v7x
    except Exception:
        vmem_phys = 64 * 1024 * 1024
    vmem_limit = int(min(0.9 * vmem_phys, 100 * 1024 * 1024))
    budget = int(0.85 * vmem_limit)                            # headroom for temporaries

    out_itemsize = jnp.dtype(x.dtype).itemsize
    # Weight tiles (worst case: double-buffered bf16 W1/W2 + f32 biases).
    fixed = 2 * (E * th * 2 + th * 4 + th * F_pad * 2 + F_pad * 4)
    # Per-row bytes: double-buffered x (f32) + double-buffered out + f32 acc + h (f32 + bf16).
    per_row = 2 * E * 4 + 2 * F_pad * out_itemsize + F_pad * 4 + th * 6
    bm = max(8, min(max_block_rows, ((budget - fixed) // per_row) // 8 * 8))
    if M <= bm:
        bm = M                                   # single full-extent row block
    n_rows = pl.cdiv(M, bm)

    single_buffer_weights = (n_k == 1)           # weights fully resident -> 1 buffer

    def build_and_run(use_buffered_1):
        def wspec(shape, imap):
            if use_buffered_1:
                return pl.BlockSpec(shape, imap, pipeline_mode=pl.Buffered(1))
            return pl.BlockSpec(shape, imap)

        in_specs = [
            pl.BlockSpec((bm, E), lambda i, k: (i, 0)),   # x: streamed rows, resident over k
            wspec((E, th), lambda i, k: (0, k)),          # W1 column tile (bf16)
            wspec((1, th), lambda i, k: (0, k)),          # b1 tile (f32)
            wspec((th, F_pad), lambda i, k: (k, 0)),      # W2 row tile (bf16)
            wspec((1, F_pad), lambda i, k: (0, 0)),       # b2 (f32)
        ]
        return pl.pallas_call(
            _mlp_kernel,
            out_shape=jax.ShapeDtypeStruct((M, F_pad), x.dtype),
            grid=(n_rows, n_k),
            in_specs=in_specs,
            out_specs=pl.BlockSpec((bm, F_pad), lambda i, k: (i, 0)),  # lane-dense store
            scratch_shapes=[pltpu.VMEM((bm, F_pad), jnp.float32)],
            compiler_params=pltpu.CompilerParams(
                dimension_semantics=(
                    "parallel" if n_rows > 1 else "arbitrary", "arbitrary"),
                vmem_limit_bytes=vmem_limit),
        )(x2d, w1p, b1p, w2p, b2p)

    if single_buffer_weights:
        try:
            out = build_and_run(True)
        except Exception:
            out = build_and_run(False)            # fallback: default double buffering
    else:
        out = build_and_run(False)

    return out[:, :F].reshape(*orig_lead, F)


# ----------------------------------------------------------------------------- main

if __name__ == "__main__":
    # Shapes implied by the module: x is [batch, seq, embed_size]; the predictor maps
    # embed_size -> embed_size*forward_expansion -> input_feature.
    input_feature = 16
    embed_size = 32
    forward_expansion = 2
    batch, seq = 2, 8
    hidden = embed_size * forward_expansion

    root = jax.random.PRNGKey(0)
    kx, k1, k2, k3, k4 = jax.random.split(root, 5)
    x = jax.random.normal(kx, (batch, seq, embed_size), jnp.float32)
    w1_t = 0.05 * jax.random.normal(k1, (embed_size, hidden), jnp.float32)
    b1 = 0.01 * jax.random.normal(k2, (1, hidden), jnp.float32)
    w2_t = 0.05 * jax.random.normal(k3, (hidden, input_feature), jnp.float32)
    b2 = 0.01 * jax.random.normal(k4, (1, input_feature), jnp.float32)

    out = masked_prediction_branch(x, w1_t, b1, w2_t, b2)
    out = jax.block_until_ready(out)

    # Pure-JAX f32 reference (Dropout is identity in the deterministic forward).
    def _gelu_tanh(v):
        c = 0.7978845608028654
        return 0.5 * v * (1.0 + jnp.tanh(c * (v + 0.044715 * v ** 3)))

    ref = (_gelu_tanh(x.reshape(-1, embed_size) @ w1_t + b1) @ w2_t + b2)
    ref = ref.reshape(batch, seq, input_feature)

    assert out.shape == (batch, seq, input_feature)
    assert bool(jnp.all(jnp.isfinite(out)))
    # bf16 MXU inputs with f32 accumulation vs. pure-f32 reference: loosened tolerance.
    assert bool(jnp.allclose(out, ref, atol=2e-2, rtol=2e-2))
    print("KERNEL_OK")
</pallas_src>

<mosaic_0001>
module attributes {stable_mosaic.version = 11 : i64} {
  func.func @_mlp_kernel(%arg0: i32, %arg1: i32, %arg2: memref<16x32xf32, #tpu.memory_space<vmem>>, %arg3: memref<32x128xbf16, #tpu.memory_space<vmem>>, %arg4: memref<1x128xf32, #tpu.memory_space<vmem>>, %arg5: memref<128x128xbf16, #tpu.memory_space<vmem>>, %arg6: memref<1x128xf32, #tpu.memory_space<vmem>>, %arg7: memref<16x128xf32, #tpu.memory_space<vmem>>, %arg8: memref<16x128xf32, #tpu.memory_space<vmem>>) attributes {dimension_semantics = [#tpu.dimension_semantics<arbitrary>, #tpu.dimension_semantics<arbitrary>], iteration_bounds = array<i64: 1, 1>, scalar_prefetch = 0 : i64, scratch_operands = 1 : i64, tpu.core_type = #tpu.core_type<tc>, window_params = [{transform_indices = @transform_0, window_bounds = array<i64: 16, 32>}, {pipeline_mode = #tpu.pipeline_mode<synchronous>, transform_indices = @transform_1, window_bounds = array<i64: 32, 128>}, {pipeline_mode = #tpu.pipeline_mode<synchronous>, transform_indices = @transform_2, window_bounds = array<i64: 1, 128>}, {pipeline_mode = #tpu.pipeline_mode<synchronous>, transform_indices = @transform_3, window_bounds = array<i64: 128, 128>}, {pipeline_mode = #tpu.pipeline_mode<synchronous>, transform_indices = @transform_4, window_bounds = array<i64: 1, 128>}, {transform_indices = @transform_5, window_bounds = array<i64: 16, 128>}]} {
    %c0_i32 = arith.constant 0 : i32
    %0 = arith.cmpi eq, %arg1, %c0_i32 : i32
    %1 = arith.extui %0 : i1 to i32
    %c0_i32_0 = arith.constant 0 : i32
    %2 = arith.cmpi ne, %1, %c0_i32_0 : i32
    scf.if %2 {
      %cst_19 = arith.constant 0.000000e+00 : f32
      %32 = vector.broadcast %cst_19 : f32 to vector<16x128xf32>
      %c0_20 = arith.constant 0 : index
      %c0_21 = arith.constant 0 : index
      %33 = vector.load %arg8[%c0_20, %c0_21] : memref<16x128xf32, #tpu.memory_space<vmem>>, vector<16x128xf32>
      tpu.vector_store %arg8[%c0_20, %c0_21], %32 {strides = array<i32>} : memref<16x128xf32, #tpu.memory_space<vmem>>, vector<16x128xf32>,
    } else {
    }
    %c0 = arith.constant 0 : index
    %c0_1 = arith.constant 0 : index
    %3 = vector.load %arg2[%c0, %c0_1] : memref<16x32xf32, #tpu.memory_space<vmem>>, vector<16x32xf32>
    %4 = arith.truncf %3 : vector<16x32xf32> to vector<16x32xbf16>
    %c0_2 = arith.constant 0 : index
    %c0_3 = arith.constant 0 : index
    %5 = vector.load %arg3[%c0_2, %c0_3] : memref<32x128xbf16, #tpu.memory_space<vmem>>, vector<32x128xbf16>
    %cst = arith.constant dense<0.000000e+00> : vector<16x128xf32>
    %6 = tpu.matmul %4, %5, %cst {dimension_numbers = #tpu.dot_dimension_numbers<[1], [0], [0], [1], [0, 0, 1, 1], [], []>} : vector<16x32xbf16>, vector<32x128xbf16>, vector<16x128xf32> -> vector<16x128xf32>
    %c0_4 = arith.constant 0 : index
    %c0_5 = arith.constant 0 : index
    %7 = vector.load %arg4[%c0_4, %c0_5] : memref<1x128xf32, #tpu.memory_space<vmem>>, vector<1x128xf32>
    %8 = vector.broadcast %7 : vector<1x128xf32> to vector<16x128xf32>
    %9 = arith.addf %6, %8 : vector<16x128xf32>
    %cst_6 = arith.constant 5.000000e-01 : f32
    %10 = vector.broadcast %cst_6 : f32 to vector<16x128xf32>
    %11 = arith.mulf %10, %9 : vector<16x128xf32>
    %cst_7 = arith.constant 4.471500e-02 : f32
    %12 = vector.broadcast %cst_7 : f32 to vector<16x128xf32>
    %13 = arith.mulf %12, %9 : vector<16x128xf32>
    %14 = arith.mulf %13, %9 : vector<16x128xf32>
    %15 = arith.mulf %14, %9 : vector<16x128xf32>
    %16 = arith.addf %9, %15 : vector<16x128xf32>
    %cst_8 = arith.constant 0.797884583 : f32
    %17 = vector.broadcast %cst_8 : f32 to vector<16x128xf32>
    %18 = arith.mulf %17, %16 : vector<16x128xf32>
    %19 = math.tanh %18 : vector<16x128xf32>
    %cst_9 = arith.constant 1.000000e+00 : f32
    %20 = vector.broadcast %cst_9 : f32 to vector<16x128xf32>
    %21 = arith.addf %20, %19 : vector<16x128xf32>
    %22 = arith.mulf %11, %21 : vector<16x128xf32>
    %c0_10 = arith.constant 0 : index
    %c0_11 = arith.constant 0 : index
    %23 = vector.load %arg8[%c0_10, %c0_11] : memref<16x128xf32, #tpu.memory_space<vmem>>, vector<16x128xf32>
    %24 = arith.truncf %22 : vector<16x128xf32> to vector<16x128xbf16>
    %c0_12 = arith.constant 0 : index
    %c0_13 = arith.constant 0 : index
    %25 = vector.load %arg5[%c0_12, %c0_13] : memref<128x128xbf16, #tpu.memory_space<vmem>>, vector<128x128xbf16>
    %cst_14 = arith.constant dense<0.000000e+00> : vector<16x128xf32>
    %26 = tpu.matmul %24, %25, %cst_14 {dimension_numbers = #tpu.dot_dimension_numbers<[1], [0], [0], [1], [0, 0, 1, 1], [], []>} : vector<16x128xbf16>, vector<128x128xbf16>, vector<16x128xf32> -> vector<16x128xf32>
    %27 = arith.addf %23, %26 : vector<16x128xf32>
    %c0_15 = arith.constant 0 : index
    %c0_16 = arith.constant 0 : index
    %28 = vector.load %arg8[%c0_15, %c0_16] : memref<16x128xf32, #tpu.memory_space<vmem>>, vector<16x128xf32>
    tpu.vector_store %arg8[%c0_15, %c0_16], %27 {strides = array<i32>} : memref<16x128xf32, #tpu.memory_space<vmem>>, vector<16x128xf32>,
    %c0_i32_17 = arith.constant 0 : i32
    %29 = arith.cmpi eq, %arg1, %c0_i32_17 : i32
    %30 = arith.extui %29 : i1 to i32
    %c0_i32_18 = arith.constant 0 : i32
    %31 = arith.cmpi ne, %30, %c0_i32_18 : i32
    scf.if %31 {
      %c0_19 = arith.constant 0 : index
      %c0_20 = arith.constant 0 : index
      %32 = vector.load %arg8[%c0_19, %c0_20] : memref<16x128xf32, #tpu.memory_space<vmem>>, vector<16x128xf32>
      %c0_21 = arith.constant 0 : index
      %c0_22 = arith.constant 0 : index
      %33 = vector.load %arg6[%c0_21, %c0_22] : memref<1x128xf32, #tpu.memory_space<vmem>>, vector<1x128xf32>
      %34 = vector.broadcast %33 : vector<1x128xf32> to vector<16x128xf32>
      %35 = arith.addf %32, %34 : vector<16x128xf32>
      %c0_23 = arith.constant 0 : index
      %c0_24 = arith.constant 0 : index
      %36 = vector.load %arg7[%c0_23, %c0_24] : memref<16x128xf32, #tpu.memory_space<vmem>>, vector<16x128xf32>
      tpu.vector_store %arg7[%c0_23, %c0_24], %35 {strides = array<i32>} : memref<16x128xf32, #tpu.memory_space<vmem>>, vector<16x128xf32>,
    } else {
    }
    return
  }
  func.func @transform_0(%arg0: i32, %arg1: i32) -> (i32, i32) {
    %c0_i32 = arith.constant 0 : i32
    %c0_i32_0 = arith.constant 0 : i32
    return %arg0, %c0_i32 : i32, i32
  }
  func.func @transform_1(%arg0: i32, %arg1: i32) -> (i32, i32) {
    %c0_i32 = arith.constant 0 : i32
    %c0_i32_0 = arith.constant 0 : i32
    return %c0_i32, %arg1 : i32, i32
  }
  func.func @transform_2(%arg0: i32, %arg1: i32) -> (i32, i32) {
    %c0_i32 = arith.constant 0 : i32
    %c0_i32_0 = arith.constant 0 : i32
    return %c0_i32, %arg1 : i32, i32
  }
  func.func @transform_3(%arg0: i32, %arg1: i32) -> (i32, i32) {
    %c0_i32 = arith.constant 0 : i32
    %c0_i32_0 = arith.constant 0 : i32
    return %arg1, %c0_i32 : i32, i32
  }
  func.func @transform_4(%arg0: i32, %arg1: i32) -> (i32, i32) {
    %c0_i32 = arith.constant 0 : i32
    %c0_i32_0 = arith.constant 0 : i32
    %c0_i32_1 = arith.constant 0 : i32
    return %c0_i32, %c0_i32_0 : i32, i32
  }
  func.func @transform_5(%arg0: i32, %arg1: i32) -> (i32, i32) {
    %c0_i32 = arith.constant 0 : i32
    %c0_i32_0 = arith.constant 0 : i32
    return %arg0, %c0_i32 : i32, i32
  }
}

module attributes {stable_mosaic.version = 11 : i64} {
  func.func @_mlp_kernel(%arg0: i32, %arg1: i32, %arg2: memref<16x32xf32, #tpu.memory_space<vmem>>, %arg3: memref<32x128xbf16, #tpu.memory_space<vmem>>, %arg4: memref<1x128xf32, #tpu.memory_space<vmem>>, %arg5: memref<128x128xbf16, #tpu.memory_space<vmem>>, %arg6: memref<1x128xf32, #tpu.memory_space<vmem>>, %arg7: memref<16x128xf32, #tpu.memory_space<vmem>>, %arg8: memref<16x128xf32, #tpu.memory_space<vmem>>) attributes {dimension_semantics = [#tpu.dimension_semantics<arbitrary>, #tpu.dimension_semantics<arbitrary>], iteration_bounds = array<i64: 1, 1>, scalar_prefetch = 0 : i64, scratch_operands = 1 : i64, tpu.core_type = #tpu.core_type<tc>, window_params = [{transform_indices = @transform_0, window_bounds = array<i64: 16, 32>}, {transform_indices = @transform_1, window_bounds = array<i64: 32, 128>}, {transform_indices = @transform_2, window_bounds = array<i64: 1, 128>}, {transform_indices = @transform_3, window_bounds = array<i64: 128, 128>}, {pipeline_mode = #tpu.pipeline_mode<synchronous>, transform_indices = @transform_4, window_bounds = array<i64: 1, 128>}, {transform_indices = @transform_5, window_bounds = array<i64: 16, 128>}]} {
    %c0_i32 = arith.constant 0 : i32
    %0 = arith.cmpi eq, %arg1, %c0_i32 : i32
    %1 = arith.extui %0 : i1 to i32
    %c0_i32_0 = arith.constant 0 : i32
    %2 = arith.cmpi ne, %1, %c0_i32_0 : i32
    scf.if %2 {
      %cst_19 = arith.constant 0.000000e+00 : f32
      %32 = vector.broadcast %cst_19 : f32 to vector<16x128xf32>
      %c0_20 = arith.constant 0 : index
      %c0_21 = arith.constant 0 : index
      %33 = vector.load %arg8[%c0_20, %c0_21] : memref<16x128xf32, #tpu.memory_space<vmem>>, vector<16x128xf32>
      tpu.vector_store %arg8[%c0_20, %c0_21], %32 {strides = array<i32>} : memref<16x128xf32, #tpu.memory_space<vmem>>, vector<16x128xf32>,
    } else {
    }
    %c0 = arith.constant 0 : index
    %c0_1 = arith.constant 0 : index
    %3 = vector.load %arg2[%c0, %c0_1] : memref<16x32xf32, #tpu.memory_space<vmem>>, vector<16x32xf32>
    %4 = arith.truncf %3 : vector<16x32xf32> to vector<16x32xbf16>
    %c0_2 = arith.constant 0 : index
    %c0_3 = arith.constant 0 : index
    %5 = vector.load %arg3[%c0_2, %c0_3] : memref<32x128xbf16, #tpu.memory_space<vmem>>, vector<32x128xbf16>
    %cst = arith.constant dense<0.000000e+00> : vector<16x128xf32>
    %6 = tpu.matmul %4, %5, %cst {dimension_numbers = #tpu.dot_dimension_numbers<[1], [0], [0], [1], [0, 0, 1, 1], [], []>} : vector<16x32xbf16>, vector<32x128xbf16>, vector<16x128xf32> -> vector<16x128xf32>
    %c0_4 = arith.constant 0 : index
    %c0_5 = arith.constant 0 : index
    %7 = vector.load %arg4[%c0_4, %c0_5] : memref<1x128xf32, #tpu.memory_space<vmem>>, vector<1x128xf32>
    %8 = vector.broadcast %7 : vector<1x128xf32> to vector<16x128xf32>
    %9 = arith.addf %6, %8 : vector<16x128xf32>
    %cst_6 = arith.constant 5.000000e-01 : f32
    %10 = vector.broadcast %cst_6 : f32 to vector<16x128xf32>
    %11 = arith.mulf %10, %9 : vector<16x128xf32>
    %cst_7 = arith.constant 4.471500e-02 : f32
    %12 = vector.broadcast %cst_7 : f32 to vector<16x128xf32>
    %13 = arith.mulf %12, %9 : vector<16x128xf32>
    %14 = arith.mulf %13, %9 : vector<16x128xf32>
    %15 = arith.mulf %14, %9 : vector<16x128xf32>
    %16 = arith.addf %9, %15 : vector<16x128xf32>
    %cst_8 = arith.constant 0.797884583 : f32
    %17 = vector.broadcast %cst_8 : f32 to vector<16x128xf32>
    %18 = arith.mulf %17, %16 : vector<16x128xf32>
    %19 = math.tanh %18 : vector<16x128xf32>
    %cst_9 = arith.constant 1.000000e+00 : f32
    %20 = vector.broadcast %cst_9 : f32 to vector<16x128xf32>
    %21 = arith.addf %20, %19 : vector<16x128xf32>
    %22 = arith.mulf %11, %21 : vector<16x128xf32>
    %c0_10 = arith.constant 0 : index
    %c0_11 = arith.constant 0 : index
    %23 = vector.load %arg8[%c0_10, %c0_11] : memref<16x128xf32, #tpu.memory_space<vmem>>, vector<16x128xf32>
    %24 = arith.truncf %22 : vector<16x128xf32> to vector<16x128xbf16>
    %c0_12 = arith.constant 0 : index
    %c0_13 = arith.constant 0 : index
    %25 = vector.load %arg5[%c0_12, %c0_13] : memref<128x128xbf16, #tpu.memory_space<vmem>>, vector<128x128xbf16>
    %cst_14 = arith.constant dense<0.000000e+00> : vector<16x128xf32>
    %26 = tpu.matmul %24, %25, %cst_14 {dimension_numbers = #tpu.dot_dimension_numbers<[1], [0], [0], [1], [0, 0, 1, 1], [], []>} : vector<16x128xbf16>, vector<128x128xbf16>, vector<16x128xf32> -> vector<16x128xf32>
    %27 = arith.addf %23, %26 : vector<16x128xf32>
    %c0_15 = arith.constant 0 : index
    %c0_16 = arith.constant 0 : index
    %28 = vector.load %arg8[%c0_15, %c0_16] : memref<16x128xf32, #tpu.memory_space<vmem>>, vector<16x128xf32>
    tpu.vector_store %arg8[%c0_15, %c0_16], %27 {strides = array<i32>} : memref<16x128xf32, #tpu.memory_space<vmem>>, vector<16x128xf32>,
    %c0_i32_17 = arith.constant 0 : i32
    %29 = arith.cmpi eq, %arg1, %c0_i32_17 : i32
    %30 = arith.extui %29 : i1 to i32
    %c0_i32_18 = arith.constant 0 : i32
    %31 = arith.cmpi ne, %30, %c0_i32_18 : i32
    scf.if %31 {
      %c0_19 = arith.constant 0 : index
      %c0_20 = arith.constant 0 : index
      %32 = vector.load %arg8[%c0_19, %c0_20] : memref<16x128xf32, #tpu.memory_space<vmem>>, vector<16x128xf32>
      %c0_21 = arith.constant 0 : index
      %c0_22 = arith.constant 0 : index
      %33 = vector.load %arg6[%c0_21, %c0_22] : memref<1x128xf32, #tpu.memory_space<vmem>>, vector<1x128xf32>
      %34 = vector.broadcast %33 : vector<1x128xf32> to vector<16x128xf32>
      %35 = arith.addf %32, %34 : vector<16x128xf32>
      %c0_23 = arith.constant 0 : index
      %c0_24 = arith.constant 0 : index
      %36 = vector.load %arg7[%c0_23, %c0_24] : memref<16x128xf32, #tpu.memory_space<vmem>>, vector<16x128xf32>
      tpu.vector_store %arg7[%c0_23, %c0_24], %35 {strides = array<i32>} : memref<16x128xf32, #tpu.memory_space<vmem>>, vector<16x128xf32>,
    } else {
    }
    return
  }
  func.func @transform_0(%arg0: i32, %arg1: i32) -> (i32, i32) {
    %c0_i32 = arith.constant 0 : i32
    %c0_i32_0 = arith.constant 0 : i32
    return %arg0, %c0_i32 : i32, i32
  }
  func.func @transform_1(%arg0: i32, %arg1: i32) -> (i32, i32) {
    %c0_i32 = arith.constant 0 : i32
    %c0_i32_0 = arith.constant 0 : i32
    return %c0_i32, %arg1 : i32, i32
  }
  func.func @transform_2(%arg0: i32, %arg1: i32) -> (i32, i32) {
    %c0_i32 = arith.constant 0 : i32
    %c0_i32_0 = arith.constant 0 : i32
    return %c0_i32, %arg1 : i32, i32
  }
  func.func @transform_3(%arg0: i32, %arg1: i32) -> (i32, i32) {
    %c0_i32 = arith.constant 0 : i32
    %c0_i32_0 = arith.constant 0 : i32
    return %arg1, %c0_i32 : i32, i32
  }
  func.func @transform_4(%arg0: i32, %arg1: i32) -> (i32, i32) {
    %c0_i32 = arith.constant 0 : i32
    %c0_i32_0 = arith.constant 0 : i32
    %c0_i32_1 = arith.constant 0 : i32
    return %c0_i32, %c0_i32_0 : i32, i32
  }
  func.func @transform_5(%arg0: i32, %arg1: i32) -> (i32, i32) {
    %c0_i32 = arith.constant 0 : i32
    %c0_i32_0 = arith.constant 0 : i32
    return %arg0, %c0_i32 : i32, i32
  }
}

</mosaic_0001>

<llo_original>
// kernel: tpu_custom_call.1
$region0: #{tpu_custom_call.1}
  #allocation0 [shape = 'u32[]', space=smem, size = 0x4, offset = 0x4, fixed_abs, tag = 'smem constant byte address 0x4 - core index']
  #allocation1 [shape = 'u32[72,128]{1,0:T(1,128)}', space=vmem, size = 0x9000, scoped, tag = 'internal scratch']
  #allocation2 [shape = 'f32[16,128]{1,0:T(8,128)}', space=vmem, size = 0x2000, scoped, tag = 'scratch operand']
  %s0 = inlined_call_operand.hbm [shape: f32[16,32], index: 0, kind: input, shape index: {}]
  %s1 = inlined_call_operand.hbm [shape: bf16[32,128], index: 1, kind: input, shape index: {}]
  %s2 = inlined_call_operand.vmem [shape: f32[1,128], index: 2, kind: input, shape index: {}]
  %s3 = inlined_call_operand.hbm [shape: bf16[128,128], index: 3, kind: input, shape index: {}]
  %s4 = inlined_call_operand.vmem [shape: f32[1,128], index: 4, kind: input, shape index: {}]
  %s5 = inlined_call_operand.hbm [shape: f32[16,128], index: 5, kind: output, shape index: {}]
  %s6 = sld [smem:[#allocation0]]
  $region50: #{tpu_custom_call.1} parent=0
    _
  %s8 = ssub.s32 1, %s6
  %s9 = scalar_select 0, %s8, %s6
  $region1: #{tpu_custom_call.1} parent=0
    #allocation3 [shape = 'u8[8192]{0}', space=vmem, size = 0x2000, scoped, tag = 'input window, operand 0, single buffered']
    #allocation4 [shape = 's32[1]{0}', space=sflag, size = 0x4, scoped, tag = 'scoped memory for tpu_custom_call.1']
    #allocation5 [shape = 's32[1]{0}', space=sflag, size = 0x4, scoped, tag = 'scoped memory for tpu_custom_call.1']
    #allocation6 [shape = 'u8[8192]{0}', space=vmem, size = 0x2000, scoped, tag = 'input window, operand 1, single buffered']
    #allocation7 [shape = 's32[1]{0}', space=sflag, size = 0x4, scoped, tag = 'scoped memory for tpu_custom_call.1']
    #allocation8 [shape = 'u8[32768]{0}', space=vmem, size = 0x8000, scoped, tag = 'input window, operand 3, single buffered']
    #allocation9 [shape = 'u8[8192]{0}', space=vmem, size = 0x2000, scoped, tag = 'output window, operand 0, single buffered']
    %10 = vsyncpa [#allocation4], 0
    %11 = vsyncpa [#allocation7], 0
    %12 = vsyncpa [#allocation5], 0
    // Predicated region
    $region2: #{tpu_custom_call.1} parent=1 // pred_check
      _
    $region3: #{tpu_custom_call.1} parent=1 // pred_check_branch
      %14 = sbr.rel (0) target = $region5
    $region4: #{tpu_custom_call.1} parent=1 // pred_region
      %16 = vsyncadd [#allocation4], 0
      %s17 = sshll.u32 %s0, 4
      %s18 = int_to_ptr.hbm [resolvable:$true] %s17
      %s19 = sshll.u32 [#allocation3], 4
      %s20 = int_to_ptr.vmem [resolvable:$true] %s19
      %25 = dma.hbm_to_vmem [thread:$0]  %s18, 256, %s20, [#allocation4], 128, 128, 8
    $region5: #{tpu_custom_call.1} parent=1 // pred_fallthru
      _
    // Predicated region
    $region6: #{tpu_custom_call.1} parent=1 // pred_check
      _
    $region7: #{tpu_custom_call.1} parent=1 // pred_check_branch
      %27 = sbr.rel (0) target = $region9
    $region8: #{tpu_custom_call.1} parent=1 // pred_region
      %29 = vsyncadd [#allocation7], 0
      %s30 = sshll.u32 %s1, 4
      %s31 = int_to_ptr.hbm [resolvable:$true] %s30
      %s32 = sshll.u32 [#allocation6], 4
      %s33 = int_to_ptr.vmem [resolvable:$true] %s32
      %38 = dma.hbm_to_vmem [thread:$0]  %s31, 256, %s33, [#allocation7], 64, 64, 4
    $region9: #{tpu_custom_call.1} parent=1 // pred_fallthru
      _
    // Predicated region
    $region10: #{tpu_custom_call.1} parent=1 // pred_check
      _
    $region11: #{tpu_custom_call.1} parent=1 // pred_check_branch
      %40 = sbr.rel (0) target = $region13
    $region12: #{tpu_custom_call.1} parent=1 // pred_region
      _
    $region13: #{tpu_custom_call.1} parent=1 // pred_fallthru
      _
    // Predicated region
    $region14: #{tpu_custom_call.1} parent=1 // pred_check
      _
    $region15: #{tpu_custom_call.1} parent=1 // pred_check_branch
      %42 = sbr.rel (0) target = $region17
    $region16: #{tpu_custom_call.1} parent=1 // pred_region
      %44 = vsyncadd [#allocation7], 0
      %s45 = sshll.u32 %s3, 4
      %s46 = int_to_ptr.hbm [resolvable:$true] %s45
      %s47 = sshll.u32 [#allocation8], 4
      %s48 = int_to_ptr.vmem [resolvable:$true] %s47
      %53 = dma.hbm_to_vmem [thread:$0]  %s46, 1024, %s48, [#allocation7], 64, 64, 4
    $region17: #{tpu_custom_call.1} parent=1 // pred_fallthru
      _
    // Predicated region
    $region18: #{tpu_custom_call.1} parent=1 // pred_check
      _
    $region19: #{tpu_custom_call.1} parent=1 // pred_check_branch
      %55 = sbr.rel (0) target = $region21
    $region20: #{tpu_custom_call.1} parent=1 // pred_region
      _
    $region21: #{tpu_custom_call.1} parent=1 // pred_fallthru
      _
    // Predicated region
    $region22: #{tpu_custom_call.1} parent=1 // pred_check
      _
    $region23: #{tpu_custom_call.1} parent=1 // pred_check_branch
      %57 = sbr.rel (0) target = $region25
    $region24: #{tpu_custom_call.1} parent=1 // pred_region
      %59 = dma.done [#allocation4], 256
    $region25: #{tpu_custom_call.1} parent=1 // pred_fallthru
      _
    // Predicated region
    $region26: #{tpu_custom_call.1} parent=1 // pred_check
      _
    $region27: #{tpu_custom_call.1} parent=1 // pred_check_branch
      %61 = sbr.rel (0) target = $region29
    $region28: #{tpu_custom_call.1} parent=1 // pred_region
      %63 = dma.done [#allocation7], 256
    $region29: #{tpu_custom_call.1} parent=1 // pred_fallthru
      _
    // Predicated region
    $region30: #{tpu_custom_call.1} parent=1 // pred_check
      _
    $region31: #{tpu_custom_call.1} parent=1 // pred_check_branch
      %65 = sbr.rel (0) target = $region33
    $region32: #{tpu_custom_call.1} parent=1 // pred_region
      %67 = dma.done [#allocation7], 1024
    $region33: #{tpu_custom_call.1} parent=1 // pred_fallthru
      _
    %p69 = scmp.eq.s32.totalorder 0, 0
    // Predicated region
    $region34: #{tpu_custom_call.1} parent=1 // pred_check
      %p70 = pneg %p69
    $region35: #{tpu_custom_call.1} parent=1 // pred_check_branch
      %72 = sbr.rel (%p70) target = $region37
    $region36: #{tpu_custom_call.1} parent=1 // pred_region
      %73 = vst [vmem:[#allocation2] sm:$0xff] 0.0
      %74 = vst [vmem:[#allocation2 + $0x8] sm:$0xff] 0.0
    $region37: #{tpu_custom_call.1} parent=1 // pred_fallthru
      _
    %v75 = vld [vmem:[#allocation3] sm:$0xff]
    %v76 = vld [vmem:[#allocation3 + $0x8] sm:$0xff]
    %v77 = vpack.c.bf16 %v76, %v75
    %v78 = vld [vmem:[#allocation6] sm:$0xf]
    %v79 = vld [vmem:[#allocation6 + $0x4] sm:$0xf]
    %v80 = vld [vmem:[#allocation6 + $0x8] sm:$0xf]
    %v81 = vld [vmem:[#allocation6 + $0xc] sm:$0xf]
    %v82 = vld [vmem:[%s2] sm:$0x1]
    %v84 = vperm.slane %v82, 0
    %v90 = vunpack.c.l.b16 %v78
    %v91 = vunpack.c.l.b16 %v79
    %v92 = vunpack.c.l.b16 %v80
    %v93 = vunpack.c.l.b16 %v81
    %v94 = vpack.c.b16 %v91, %v90
    %v95 = vpack.c.b16 %v93, %v92
    %vm98 = vcmask 261120
    %v100 = vsel %vm98, %v77, 0
    %102 = vmatpush.bf16.msra.mxu0 0
    %103 = vmatpush.bf16.msra.mxu0 0
    %104 = vmatpush.bf16.msra.mxu0 0
    %105 = vmatpush.bf16.msra.mxu0 0
    %106 = vmatpush.bf16.msra.mxu0 0
    %107 = vmatpush.bf16.msra.mxu0 0
    %108 = vmatpush.bf16.msra.mxu0 %v95
    %109 = vmatpush.bf16.msra.mxu0 %v94
    %110 = vmatmul.bf16.gmra.mxu0 %v100
    %v111 = vpop.f32.mrf.mxu0
    %v112 = vadd.f32 %v84, %v111
    %v113 = vpop.f32.mrf.mxu0
    %v114 = vadd.f32 %v84, %v113
    %115 = vdwg.mxu0
    %v116 = vmul.f32 %v112, 0.5
    %v117 = vmul.f32 %v114, 0.5
    %v118 = vmul.f32 %v112, 0.044715
    %v119 = vmul.f32 %v114, 0.044715
    %v120 = vmul.f32 %v118, %v112
    %v121 = vmul.f32 %v119, %v114
    %v122 = vmul.f32 %v120, %v112
    %v123 = vmul.f32 %v121, %v114
    %v124 = vadd.f32 %v112, %v122
    %v125 = vadd.f32 %v114, %v123
    %v126 = vmul.f32 %v124, 0.7978846
    %v127 = vmul.f32 %v125, 0.7978846
    %v128 = vtanh.pop %v126
    %v129 = vtanh.pop %v127
    %v130 = vadd.f32 %v128, 1.0
    %v131 = vadd.f32 %v129, 1.0
    %v132 = vmul.f32 %v116, %v130
    %v133 = vmul.f32 %v117, %v131
    %v134 = vld [vmem:[#allocation2] sm:$0xff]
    %v135 = vld [vmem:[#allocation2 + $0x8] sm:$0xff]
    %v136 = vpack.c.bf16 %v133, %v132
    %v137 = vld [vmem:[#allocation8] sm:$0xf]
    %v138 = vld [vmem:[#allocation8 + $0x4] sm:$0xf]
    %v139 = vld [vmem:[#allocation8 + $0x8] sm:$0xf]
    %v140 = vld [vmem:[#allocation8 + $0xc] sm:$0xf]
    %v141 = vld [vmem:[#allocation8 + $0x10] sm:$0xf]
    %v142 = vld [vmem:[#allocation8 + $0x14] sm:$0xf]
    %v143 = vld [vmem:[#allocation8 + $0x18] sm:$0xf]
    %v144 = vld [vmem:[#allocation8 + $0x1c] sm:$0xf]
    %v145 = vld [vmem:[#allocation8 + $0x20] sm:$0xf]
    %v146 = vld [vmem:[#allocation8 + $0x24] sm:$0xf]
    %v147 = vld [vmem:[#allocation8 + $0x28] sm:$0xf]
    %v148 = vld [vmem:[#allocation8 + $0x2c] sm:$0xf]
    %v149 = vld [vmem:[#allocation8 + $0x30] sm:$0xf]
    %v150 = vld [vmem:[#allocation8 + $0x34] sm:$0xf]
    %v151 = vld [vmem:[#allocation8 + $0x38] sm:$0xf]
    %v152 = vld [vmem:[#allocation8 + $0x3c] sm:$0xf]
    %v169 = vunpack.c.l.b16 %v137
    %v170 = vunpack.c.l.b16 %v138
    %v171 = vunpack.c.l.b16 %v139
    %v172 = vunpack.c.l.b16 %v140
    %v173 = vunpack.c.l.b16 %v141
    %v174 = vunpack.c.l.b16 %v142
    %v175 = vunpack.c.l.b16 %v143
    %v176 = vunpack.c.l.b16 %v144
    %v177 = vunpack.c.l.b16 %v145
    %v178 = vunpack.c.l.b16 %v146
    %v179 = vunpack.c.l.b16 %v147
    %v180 = vunpack.c.l.b16 %v148
    %v181 = vunpack.c.l.b16 %v149
    %v182 = vunpack.c.l.b16 %v150
    %v183 = vunpack.c.l.b16 %v151
    %v184 = vunpack.c.l.b16 %v152
    %v185 = vpack.c.b16 %v170, %v169
    %v186 = vpack.c.b16 %v172, %v171
    %v187 = vpack.c.b16 %v174, %v173
    %v188 = vpack.c.b16 %v176, %v175
    %v189 = vpack.c.b16 %v178, %v177
    %v190 = vpack.c.b16 %v180, %v179
    %v191 = vpack.c.b16 %v182, %v181
    %v192 = vpack.c.b16 %v184, %v183
    %201 = vmatpush.bf16.msra.mxu0 %v192
    %202 = vmatpush.bf16.msra.mxu0 %v191
    %203 = vmatpush.bf16.msra.mxu0 %v190
    %204 = vmatpush.bf16.msra.mxu0 %v189
    %205 = vmatpush.bf16.msra.mxu0 %v188
    %206 = vmatpush.bf16.msra.mxu0 %v187
    %207 = vmatpush.bf16.msra.mxu0 %v186
    %208 = vmatpush.bf16.msra.mxu0 %v185
    %209 = vmatmul.bf16.gmra.mxu0 %v136
    %v210 = vpop.f32.mrf.mxu0
    %v211 = vadd.f32 0.0, %v210
    %v212 = vpop.f32.mrf.mxu0
    %v213 = vadd.f32 0.0, %v212
    %214 = vdwg.mxu0
    %v215 = vadd.f32 %v134, %v211
    %v216 = vadd.f32 %v135, %v213
    %217 = vst [vmem:[#allocation2] sm:$0xff] %v215
    %218 = vst [vmem:[#allocation2 + $0x8] sm:$0xff] %v216
    // Predicated region
    $region38: #{tpu_custom_call.1} parent=1 // pred_check
      %p219 = pneg %p69
    $region39: #{tpu_custom_call.1} parent=1 // pred_check_branch
      %221 = sbr.rel (%p219) target = $region41
    $region40: #{tpu_custom_call.1} parent=1 // pred_region
      %v222 = vld [vmem:[#allocation2] sm:$0xff]
      %v223 = vld [vmem:[#allocation2 + $0x8] sm:$0xff]
      %v224 = vld [vmem:[%s4] sm:$0x1]
      %v226 = vperm.slane %v224, 0
      %v228 = vadd.f32 %v222, %v226
      %v229 = vadd.f32 %v223, %v226
      %230 = vst [vmem:[#allocation9] sm:$0xff] %v228
      %231 = vst [vmem:[#allocation9 + $0x8] sm:$0xff] %v229
    $region41: #{tpu_custom_call.1} parent=1 // pred_fallthru
      _
    // Predicated region
    $region42: #{tpu_custom_call.1} parent=1 // pred_check
      _
    $region43: #{tpu_custom_call.1} parent=1 // pred_check_branch
      %233 = sbr.rel (0) target = $region45
    $region44: #{tpu_custom_call.1} parent=1 // pred_region
      %235 = vsyncadd [#allocation5], 0
      %s236 = sshll.u32 [#allocation9], 4
      %s237 = int_to_ptr.vmem [resolvable:$true] %s236
      %s238 = sshll.u32 %s5, 4
      %s239 = int_to_ptr.hbm [resolvable:$true] %s238
      %244 = dma.vmem_to_hbm [thread:$0]  %s237, 256, %s239, [#allocation5], 128, 128, 8
    $region45: #{tpu_custom_call.1} parent=1 // pred_fallthru
      _
    // Predicated region
    $region46: #{tpu_custom_call.1} parent=1 // pred_check
      _
    $region47: #{tpu_custom_call.1} parent=1 // pred_check_branch
      %246 = sbr.rel (0) target = $region49
    $region48: #{tpu_custom_call.1} parent=1 // pred_region
      %248 = dma.done [#allocation5], 256
    $region49: #{tpu_custom_call.1} parent=1 // pred_fallthru
      _
    %249 = vsyncpa [#allocation4], 1
    %250 = vsyncpa [#allocation7], 1
    %251 = vsyncpa [#allocation5], 1

// kernel: tpu_custom_call.1
$region0: #{tpu_custom_call.1}
  #allocation0 [shape = 'u32[]', space=smem, size = 0x4, offset = 0x4, fixed_abs, tag = 'smem constant byte address 0x4 - core index']
  #allocation1 [shape = 'u32[72,128]{1,0:T(1,128)}', space=vmem, size = 0x9000, scoped, tag = 'internal scratch']
  #allocation2 [shape = 'f32[16,128]{1,0:T(8,128)}', space=vmem, size = 0x2000, scoped, tag = 'scratch operand']
  %s0 = inlined_call_operand.hbm [shape: f32[16,32], index: 0, kind: input, shape index: {}]
  %s1 = inlined_call_operand.hbm [shape: bf16[32,128], index: 1, kind: input, shape index: {}]
  %s2 = inlined_call_operand.vmem [shape: f32[1,128], index: 2, kind: input, shape index: {}]
  %s3 = inlined_call_operand.hbm [shape: bf16[128,128], index: 3, kind: input, shape index: {}]
  %s4 = inlined_call_operand.vmem [shape: f32[1,128], index: 4, kind: input, shape index: {}]
  %s5 = inlined_call_operand.hbm [shape: f32[16,128], index: 5, kind: output, shape index: {}]
  %s6 = sld [smem:[#allocation0]]
  $region50: #{tpu_custom_call.1} parent=0
    _
  %s8 = ssub.s32 1, %s6
  %s9 = scalar_select 0, %s8, %s6
  $region1: #{tpu_custom_call.1} parent=0
    #allocation3 [shape = 'u8[8192]{0}', space=vmem, size = 0x2000, scoped, tag = 'input window, operand 0, single buffered']
    #allocation4 [shape = 's32[1]{0}', space=sflag, size = 0x4, scoped, tag = 'scoped memory for tpu_custom_call.1']
    #allocation5 [shape = 's32[1]{0}', space=sflag, size = 0x4, scoped, tag = 'scoped memory for tpu_custom_call.1']
    #allocation6 [shape = 'u8[8192]{0}', space=vmem, size = 0x2000, scoped, tag = 'input window, operand 1, single buffered']
    #allocation7 [shape = 's32[1]{0}', space=sflag, size = 0x4, scoped, tag = 'scoped memory for tpu_custom_call.1']
    #allocation8 [shape = 'u8[32768]{0}', space=vmem, size = 0x8000, scoped, tag = 'input window, operand 3, single buffered']
    #allocation9 [shape = 'u8[8192]{0}', space=vmem, size = 0x2000, scoped, tag = 'output window, operand 0, single buffered']
    %10 = vsyncpa [#allocation4], 0
    %11 = vsyncpa [#allocation7], 0
    %12 = vsyncpa [#allocation5], 0
    // Predicated region
    $region2: #{tpu_custom_call.1} parent=1 // pred_check
      _
    $region3: #{tpu_custom_call.1} parent=1 // pred_check_branch
      %14 = sbr.rel (0) target = $region5
    $region4: #{tpu_custom_call.1} parent=1 // pred_region
      %16 = vsyncadd [#allocation4], 0
      %s17 = sshll.u32 %s0, 4
      %s18 = int_to_ptr.hbm [resolvable:$true] %s17
      %s19 = sshll.u32 [#allocation3], 4
      %s20 = int_to_ptr.vmem [resolvable:$true] %s19
      %25 = dma.hbm_to_vmem [thread:$0]  %s18, 256, %s20, [#allocation4], 128, 128, 8
    $region5: #{tpu_custom_call.1} parent=1 // pred_fallthru
      _
    // Predicated region
    $region6: #{tpu_custom_call.1} parent=1 // pred_check
      _
    $region7: #{tpu_custom_call.1} parent=1 // pred_check_branch
      %27 = sbr.rel (0) target = $region9
    $region8: #{tpu_custom_call.1} parent=1 // pred_region
      %29 = vsyncadd [#allocation7], 0
      %s30 = sshll.u32 %s1, 4
      %s31 = int_to_ptr.hbm [resolvable:$true] %s30
      %s32 = sshll.u32 [#allocation6], 4
      %s33 = int_to_ptr.vmem [resolvable:$true] %s32
      %38 = dma.hbm_to_vmem [thread:$0]  %s31, 256, %s33, [#allocation7], 64, 64, 4
    $region9: #{tpu_custom_call.1} parent=1 // pred_fallthru
      _
    // Predicated region
    $region10: #{tpu_custom_call.1} parent=1 // pred_check
      _
    $region11: #{tpu_custom_call.1} parent=1 // pred_check_branch
      %40 = sbr.rel (0) target = $region13
    $region12: #{tpu_custom_call.1} parent=1 // pred_region
      _
    $region13: #{tpu_custom_call.1} parent=1 // pred_fallthru
      _
    // Predicated region
    $region14: #{tpu_custom_call.1} parent=1 // pred_check
      _
    $region15: #{tpu_custom_call.1} parent=1 // pred_check_branch
      %42 = sbr.rel (0) target = $region17
    $region16: #{tpu_custom_call.1} parent=1 // pred_region
      %44 = vsyncadd [#allocation7], 0
      %s45 = sshll.u32 %s3, 4
      %s46 = int_to_ptr.hbm [resolvable:$true] %s45
      %s47 = sshll.u32 [#allocation8], 4
      %s48 = int_to_ptr.vmem [resolvable:$true] %s47
      %53 = dma.hbm_to_vmem [thread:$0]  %s46, 1024, %s48, [#allocation7], 64, 64, 4
    $region17: #{tpu_custom_call.1} parent=1 // pred_fallthru
      _
    // Predicated region
    $region18: #{tpu_custom_call.1} parent=1 // pred_check
      _
    $region19: #{tpu_custom_call.1} parent=1 // pred_check_branch
      %55 = sbr.rel (0) target = $region21
    $region20: #{tpu_custom_call.1} parent=1 // pred_region
      _
    $region21: #{tpu_custom_call.1} parent=1 // pred_fallthru
      _
    // Predicated region
    $region22: #{tpu_custom_call.1} parent=1 // pred_check
      _
    $region23: #{tpu_custom_call.1} parent=1 // pred_check_branch
      %57 = sbr.rel (0) target = $region25
    $region24: #{tpu_custom_call.1} parent=1 // pred_region
      %59 = dma.done [#allocation4], 256
    $region25: #{tpu_custom_call.1} parent=1 // pred_fallthru
      _
    // Predicated region
    $region26: #{tpu_custom_call.1} parent=1 // pred_check
      _
    $region27: #{tpu_custom_call.1} parent=1 // pred_check_branch
      %61 = sbr.rel (0) target = $region29
    $region28: #{tpu_custom_call.1} parent=1 // pred_region
      %63 = dma.done [#allocation7], 256
    $region29: #{tpu_custom_call.1} parent=1 // pred_fallthru
      _
    // Predicated region
    $region30: #{tpu_custom_call.1} parent=1 // pred_check
      _
    $region31: #{tpu_custom_call.1} parent=1 // pred_check_branch
      %65 = sbr.rel (0) target = $region33
    $region32: #{tpu_custom_call.1} parent=1 // pred_region
      %67 = dma.done [#allocation7], 1024
    $region33: #{tpu_custom_call.1} parent=1 // pred_fallthru
      _
    %p69 = scmp.eq.s32.totalorder 0, 0
    // Predicated region
    $region34: #{tpu_custom_call.1} parent=1 // pred_check
      %p70 = pneg %p69
    $region35: #{tpu_custom_call.1} parent=1 // pred_check_branch
      %72 = sbr.rel (%p70) target = $region37
    $region36: #{tpu_custom_call.1} parent=1 // pred_region
      %73 = vst [vmem:[#allocation2] sm:$0xff] 0.0
      %74 = vst [vmem:[#allocation2 + $0x8] sm:$0xff] 0.0
    $region37: #{tpu_custom_call.1} parent=1 // pred_fallthru
      _
    %v75 = vld [vmem:[#allocation3] sm:$0xff]
    %v76 = vld [vmem:[#allocation3 + $0x8] sm:$0xff]
    %v77 = vpack.c.bf16 %v76, %v75
    %v78 = vld [vmem:[#allocation6] sm:$0xf]
    %v79 = vld [vmem:[#allocation6 + $0x4] sm:$0xf]
    %v80 = vld [vmem:[#allocation6 + $0x8] sm:$0xf]
    %v81 = vld [vmem:[#allocation6 + $0xc] sm:$0xf]
    %v82 = vld [vmem:[%s2] sm:$0x1]
    %v84 = vperm.slane %v82, 0
    %v90 = vunpack.c.l.b16 %v78
    %v91 = vunpack.c.l.b16 %v79
    %v92 = vunpack.c.l.b16 %v80
    %v93 = vunpack.c.l.b16 %v81
    %v94 = vpack.c.b16 %v91, %v90
    %v95 = vpack.c.b16 %v93, %v92
    %vm98 = vcmask 261120
    %v100 = vsel %vm98, %v77, 0
    %102 = vmatpush.bf16.msra.mxu0 0
    %103 = vmatpush.bf16.msra.mxu0 0
    %104 = vmatpush.bf16.msra.mxu0 0
    %105 = vmatpush.bf16.msra.mxu0 0
    %106 = vmatpush.bf16.msra.mxu0 0
    %107 = vmatpush.bf16.msra.mxu0 0
    %108 = vmatpush.bf16.msra.mxu0 %v95
    %109 = vmatpush.bf16.msra.mxu0 %v94
    %110 = vmatmul.bf16.gmra.mxu0 %v100
    %v111 = vpop.f32.mrf.mxu0
    %v112 = vadd.f32 %v84, %v111
    %v113 = vpop.f32.mrf.mxu0
    %v114 = vadd.f32 %v84, %v113
    %115 = vdwg.mxu0
    %v116 = vmul.f32 %v112, 0.5
    %v117 = vmul.f32 %v114, 0.5
    %v118 = vmul.f32 %v112, 0.044715
    %v119 = vmul.f32 %v114, 0.044715
    %v120 = vmul.f32 %v118, %v112
    %v121 = vmul.f32 %v119, %v114
    %v122 = vmul.f32 %v120, %v112
    %v123 = vmul.f32 %v121, %v114
    %v124 = vadd.f32 %v112, %v122
    %v125 = vadd.f32 %v114, %v123
    %v126 = vmul.f32 %v124, 0.7978846
    %v127 = vmul.f32 %v125, 0.7978846
    %v128 = vtanh.pop %v126
    %v129 = vtanh.pop %v127
    %v130 = vadd.f32 %v128, 1.0
    %v131 = vadd.f32 %v129, 1.0
    %v132 = vmul.f32 %v116, %v130
    %v133 = vmul.f32 %v117, %v131
    %v134 = vld [vmem:[#allocation2] sm:$0xff]
    %v135 = vld [vmem:[#allocation2 + $0x8] sm:$0xff]
    %v136 = vpack.c.bf16 %v133, %v132
    %v137 = vld [vmem:[#allocation8] sm:$0xf]
    %v138 = vld [vmem:[#allocation8 + $0x4] sm:$0xf]
    %v139 = vld [vmem:[#allocation8 + $0x8] sm:$0xf]
    %v140 = vld [vmem:[#allocation8 + $0xc] sm:$0xf]
    %v141 = vld [vmem:[#allocation8 + $0x10] sm:$0xf]
    %v142 = vld [vmem:[#allocation8 + $0x14] sm:$0xf]
    %v143 = vld [vmem:[#allocation8 + $0x18] sm:$0xf]
    %v144 = vld [vmem:[#allocation8 + $0x1c] sm:$0xf]
    %v145 = vld [vmem:[#allocation8 + $0x20] sm:$0xf]
    %v146 = vld [vmem:[#allocation8 + $0x24] sm:$0xf]
    %v147 = vld [vmem:[#allocation8 + $0x28] sm:$0xf]
    %v148 = vld [vmem:[#allocation8 + $0x2c] sm:$0xf]
    %v149 = vld [vmem:[#allocation8 + $0x30] sm:$0xf]
    %v150 = vld [vmem:[#allocation8 + $0x34] sm:$0xf]
    %v151 = vld [vmem:[#allocation8 + $0x38] sm:$0xf]
    %v152 = vld [vmem:[#allocation8 + $0x3c] sm:$0xf]
    %v169 = vunpack.c.l.b16 %v137
    %v170 = vunpack.c.l.b16 %v138
    %v171 = vunpack.c.l.b16 %v139
    %v172 = vunpack.c.l.b16 %v140
    %v173 = vunpack.c.l.b16 %v141
    %v174 = vunpack.c.l.b16 %v142
    %v175 = vunpack.c.l.b16 %v143
    %v176 = vunpack.c.l.b16 %v144
    %v177 = vunpack.c.l.b16 %v145
    %v178 = vunpack.c.l.b16 %v146
    %v179 = vunpack.c.l.b16 %v147
    %v180 = vunpack.c.l.b16 %v148
    %v181 = vunpack.c.l.b16 %v149
    %v182 = vunpack.c.l.b16 %v150
    %v183 = vunpack.c.l.b16 %v151
    %v184 = vunpack.c.l.b16 %v152
    %v185 = vpack.c.b16 %v170, %v169
    %v186 = vpack.c.b16 %v172, %v171
    %v187 = vpack.c.b16 %v174, %v173
    %v188 = vpack.c.b16 %v176, %v175
    %v189 = vpack.c.b16 %v178, %v177
    %v190 = vpack.c.b16 %v180, %v179
    %v191 = vpack.c.b16 %v182, %v181
    %v192 = vpack.c.b16 %v184, %v183
    %201 = vmatpush.bf16.msra.mxu0 %v192
    %202 = vmatpush.bf16.msra.mxu0 %v191
    %203 = vmatpush.bf16.msra.mxu0 %v190
    %204 = vmatpush.bf16.msra.mxu0 %v189
    %205 = vmatpush.bf16.msra.mxu0 %v188
    %206 = vmatpush.bf16.msra.mxu0 %v187
    %207 = vmatpush.bf16.msra.mxu0 %v186
    %208 = vmatpush.bf16.msra.mxu0 %v185
    %209 = vmatmul.bf16.gmra.mxu0 %v136
    %v210 = vpop.f32.mrf.mxu0
    %v211 = vadd.f32 0.0, %v210
    %v212 = vpop.f32.mrf.mxu0
    %v213 = vadd.f32 0.0, %v212
    %214 = vdwg.mxu0
    %v215 = vadd.f32 %v134, %v211
    %v216 = vadd.f32 %v135, %v213
    %217 = vst [vmem:[#allocation2] sm:$0xff] %v215
    %218 = vst [vmem:[#allocation2 + $0x8] sm:$0xff] %v216
    // Predicated region
    $region38: #{tpu_custom_call.1} parent=1 // pred_check
      %p219 = pneg %p69
    $region39: #{tpu_custom_call.1} parent=1 // pred_check_branch
      %221 = sbr.rel (%p219) target = $region41
    $region40: #{tpu_custom_call.1} parent=1 // pred_region
      %v222 = vld [vmem:[#allocation2] sm:$0xff]
      %v223 = vld [vmem:[#allocation2 + $0x8] sm:$0xff]
      %v224 = vld [vmem:[%s4] sm:$0x1]
      %v226 = vperm.slane %v224, 0
      %v228 = vadd.f32 %v222, %v226
      %v229 = vadd.f32 %v223, %v226
      %230 = vst [vmem:[#allocation9] sm:$0xff] %v228
      %231 = vst [vmem:[#allocation9 + $0x8] sm:$0xff] %v229
    $region41: #{tpu_custom_call.1} parent=1 // pred_fallthru
      _
    // Predicated region
    $region42: #{tpu_custom_call.1} parent=1 // pred_check
      _
    $region43: #{tpu_custom_call.1} parent=1 // pred_check_branch
      %233 = sbr.rel (0) target = $region45
    $region44: #{tpu_custom_call.1} parent=1 // pred_region
      %235 = vsyncadd [#allocation5], 0
      %s236 = sshll.u32 [#allocation9], 4
      %s237 = int_to_ptr.vmem [resolvable:$true] %s236
      %s238 = sshll.u32 %s5, 4
      %s239 = int_to_ptr.hbm [resolvable:$true] %s238
      %244 = dma.vmem_to_hbm [thread:$0]  %s237, 256, %s239, [#allocation5], 128, 128, 8
    $region45: #{tpu_custom_call.1} parent=1 // pred_fallthru
      _
    // Predicated region
    $region46: #{tpu_custom_call.1} parent=1 // pred_check
      _
    $region47: #{tpu_custom_call.1} parent=1 // pred_check_branch
      %246 = sbr.rel (0) target = $region49
    $region48: #{tpu_custom_call.1} parent=1 // pred_region
      %248 = dma.done [#allocation5], 256
    $region49: #{tpu_custom_call.1} parent=1 // pred_fallthru
      _
    %249 = vsyncpa [#allocation4], 1
    %250 = vsyncpa [#allocation7], 1
    %251 = vsyncpa [#allocation5], 1

</llo_original>
